<compile_context>
chip_gen: v7x
topology: tpu7x:2x2x1
jax: 0.10.0
libtpu: 0.0.40
codegen_flags: <defaults>
</compile_context>

<pallas_src>
import jax
import jax.numpy as jnp
from jax.experimental import pallas as pl
from jax.experimental.pallas import tpu as pltpu

LANEW = 1024         # last-dim width: large multiple of 128 -> wide unmasked vst runs
SUB = 8              # sublane quantum (rows per vreg tile)
ROW_CHUNK = 8        # in-kernel slab height: one sublane group per step
TR_ROWS_MAX = 128    # 128 rows x 1024 lanes = 131072 voxels per grid step


def _round_up(a, b):
    return ((a + b - 1) // b) * b


def conv1x1x1_kernel(w_ref, b_ref, x_ref, o_ref):
    # w_ref, b_ref: (C_out,) f32 scalars in SMEM
    # x_ref: (1, TR, LANEW)          subsampled input voxels (single in-channel)
    # o_ref: (1, C_out, TR, LANEW)   output voxels, already in NCDHW memory order
    c_out = o_ref.shape[1]
    tr = x_ref.shape[1]
    # Walk the tile in 8-row slabs so each x slab is loaded from VMEM once and
    # reused across all C_out scalar FMAs (keeps vreg pressure bounded even for
    # the 128-row tiles, which would not fit the 64-vreg file if loaded whole).
    for r0 in range(0, tr, ROW_CHUNK):
        xv = x_ref[0, r0:r0 + ROW_CHUNK, :]                  # (8, LANEW) slab
        for c in range(c_out):                               # static unroll over C_out
            o_ref[0, c, r0:r0 + ROW_CHUNK, :] = xv * w_ref[c] + b_ref[c]


def conv3d_k1_s2(x, weight, bias):
    """Equivalent of nn.Conv3d(1, C_out, kernel_size=1, stride=2) forward.

    x:      (N, 1, D, H, W) float32
    weight: (C_out, 1, 1, 1, 1) float32
    bias:   (C_out,) float32
    returns (N, C_out, Do, Ho, Wo) float32
    """
    N, C_in, D, H, W = x.shape
    assert C_in == 1
    C_out = weight.shape[0]

    # kernel_size=1, stride=2 only ever touches every 2nd voxel.
    # TODO(synk): fold the stride-2 decimation into the kernel (even-D planes
    # via index_map, even-H/W via in-kernel lane selection) so the subsampled
    # tensor never round-trips HBM; lane-strided in-kernel selection is not
    # guaranteed to lower on Mosaic today, so it remains a single fused XLA
    # strided-slice pass here.
    x_sub = x[:, 0, ::2, ::2, ::2]                  # (N, Do, Ho, Wo)
    Do, Ho, Wo = x_sub.shape[1:]
    Mn = Do * Ho * Wo                               # voxels per sample

    # Lane/sublane-dense view of each sample's voxel axis: (rows, 1024).
    rows_needed = max(pl.cdiv(Mn, LANEW), 1)

    if rows_needed <= TR_ROWS_MAX:
        TR = _round_up(rows_needed, SUB)            # multiple of 8 -> dense vst
        n_tiles = 1
        # v7x has 2 TensorCores: never let the whole grid collapse to a single
        # step when there is enough work to split the voxel axis.
        if N == 1 and rows_needed > SUB:
            TR = _round_up(pl.cdiv(rows_needed, 2), SUB)
            n_tiles = 2
    else:
        TR = TR_ROWS_MAX                            # multiple of 8
        n_tiles = pl.cdiv(rows_needed, TR)          # >= 2 here
    Rp = n_tiles * TR
    Mp = Rp * LANEW

    x_flat = x_sub.reshape(N, Mn).astype(jnp.float32)
    if Mp != Mn:                                    # ragged tail: pad, not assert
        x_flat = jnp.pad(x_flat, ((0, 0), (0, Mp - Mn)))
    x_tiled = x_flat.reshape(N, Rp, LANEW)

    w_vec = weight.reshape(C_out).astype(jnp.float32)
    b_vec = bias.reshape(C_out).astype(jnp.float32)

    out = pl.pallas_call(
        conv1x1x1_kernel,
        out_shape=jax.ShapeDtypeStruct((N, C_out, Rp, LANEW), jnp.float32),
        grid=(N, n_tiles),
        in_specs=[
            pl.BlockSpec(memory_space=pltpu.MemorySpace.SMEM),   # weight scalars
            pl.BlockSpec(memory_space=pltpu.MemorySpace.SMEM),   # bias scalars
            pl.BlockSpec((1, TR, LANEW), lambda n, i: (n, i, 0)),
        ],
        out_specs=pl.BlockSpec((1, C_out, TR, LANEW), lambda n, i: (n, 0, i, 0)),
        compiler_params=pltpu.CompilerParams(
            dimension_semantics=("parallel", "parallel"),
            # Explicit scoped-VMEM budget: tile double-buffer is ~5 MiB, well
            # under 32 MiB on every generation (v5e default is only 16 MiB).
            vmem_limit_bytes=32 * 1024 * 1024,
        ),
    )(w_vec, b_vec, x_tiled)

    # (N, C_out, Rp, 1024) is already NCDHW memory order: only free reshapes,
    # plus a slice that exists only when lane padding was added.
    out = out.reshape(N, C_out, Mp)
    if Mp != Mn:
        out = out[:, :, :Mn]
    return out.reshape(N, C_out, Do, Ho, Wo)


if __name__ == "__main__":
    key = jax.random.PRNGKey(0)
    kx, kw, kb = jax.random.split(key, 3)

    # Small NCDHW input consistent with Conv3d(1, 4, k=1, s=2).
    N, C_in, D, H, W = 2, 1, 8, 16, 16
    x = jax.random.normal(kx, (N, C_in, D, H, W), dtype=jnp.float32)

    # Deterministic synthetic parameters (shapes from nn.Conv3d(1, 4, 1)).
    C_out = 4
    weight = jax.random.normal(kw, (C_out, C_in, 1, 1, 1), dtype=jnp.float32)
    bias = jax.random.normal(kb, (C_out,), dtype=jnp.float32)

    out = jax.block_until_ready(conv3d_k1_s2(x, weight, bias))

    # Reference (plain JAX) sanity check of the conv semantics.
    x_sub = x[:, 0, ::2, ::2, ::2]                  # (N, Do, Ho, Wo)
    ref = (x_sub[:, None] * weight.reshape(1, C_out, 1, 1, 1)
           + bias.reshape(1, C_out, 1, 1, 1))
    assert out.shape == (N, C_out, 4, 8, 8), out.shape
    assert jnp.allclose(out, ref, atol=1e-5, rtol=1e-5)

    print("KERNEL_OK")
</pallas_src>

<mosaic_0001>
module attributes {stable_mosaic.version = 11 : i64} {
  func.func @conv1x1x1_kernel(%arg0: i32, %arg1: i32, %arg2: memref<4xf32, #tpu.memory_space<smem>>, %arg3: memref<4xf32, #tpu.memory_space<smem>>, %arg4: memref<1x8x1024xf32, #tpu.memory_space<vmem>>, %arg5: memref<1x4x8x1024xf32, #tpu.memory_space<vmem>>) attributes {dimension_semantics = [#tpu.dimension_semantics<parallel>, #tpu.dimension_semantics<parallel>], iteration_bounds = array<i64: 2, 1>, scalar_prefetch = 0 : i64, scratch_operands = 0 : i64, tpu.core_type = #tpu.core_type<tc>, window_params = [{transform_indices = @transform_0, window_bounds = array<i64: 4>}, {transform_indices = @transform_1, window_bounds = array<i64: 4>}, {transform_indices = @transform_2, window_bounds = array<i64: 1, 8, 1024>}, {transform_indices = @transform_3, window_bounds = array<i64: 1, 4, 8, 1024>}]} {
    %c0 = arith.constant 0 : index
    %c0_0 = arith.constant 0 : index
    %c0_1 = arith.constant 0 : index
    %0 = vector.load %arg4[%c0, %c0_0, %c0_1] : memref<1x8x1024xf32, #tpu.memory_space<vmem>>, vector<1x8x1024xf32>
    %1 = vector.shape_cast %0 : vector<1x8x1024xf32> to vector<8x1024xf32>
    %c0_2 = arith.constant 0 : index
    %2 = memref.load %arg2[%c0_2] : memref<4xf32, #tpu.memory_space<smem>>
    %3 = vector.broadcast %2 : f32 to vector<8x1024xf32>
    %4 = arith.mulf %1, %3 : vector<8x1024xf32>
    %c0_3 = arith.constant 0 : index
    %5 = memref.load %arg3[%c0_3] : memref<4xf32, #tpu.memory_space<smem>>
    %6 = vector.broadcast %5 : f32 to vector<8x1024xf32>
    %7 = arith.addf %4, %6 : vector<8x1024xf32>
    %c0_4 = arith.constant 0 : index
    %c0_5 = arith.constant 0 : index
    %c0_6 = arith.constant 0 : index
    %c0_7 = arith.constant 0 : index
    %8 = vector.load %arg5[%c0_4, %c0_5, %c0_6, %c0_7] : memref<1x4x8x1024xf32, #tpu.memory_space<vmem>>, vector<1x1x8x1024xf32>
    %9 = vector.shape_cast %8 : vector<1x1x8x1024xf32> to vector<8x1024xf32>
    %10 = vector.shape_cast %7 : vector<8x1024xf32> to vector<1x1x8x1024xf32>
    tpu.vector_store %arg5[%c0_4, %c0_5, %c0_6, %c0_7], %10 {strides = array<i32>} : memref<1x4x8x1024xf32, #tpu.memory_space<vmem>>, vector<1x1x8x1024xf32>,
    %c1 = arith.constant 1 : index
    %11 = memref.load %arg2[%c1] : memref<4xf32, #tpu.memory_space<smem>>
    %12 = vector.broadcast %11 : f32 to vector<8x1024xf32>
    %13 = arith.mulf %1, %12 : vector<8x1024xf32>
    %c1_8 = arith.constant 1 : index
    %14 = memref.load %arg3[%c1_8] : memref<4xf32, #tpu.memory_space<smem>>
    %15 = vector.broadcast %14 : f32 to vector<8x1024xf32>
    %16 = arith.addf %13, %15 : vector<8x1024xf32>
    %c0_9 = arith.constant 0 : index
    %c1_10 = arith.constant 1 : index
    %c0_11 = arith.constant 0 : index
    %c0_12 = arith.constant 0 : index
    %17 = vector.load %arg5[%c0_9, %c1_10, %c0_11, %c0_12] : memref<1x4x8x1024xf32, #tpu.memory_space<vmem>>, vector<1x1x8x1024xf32>
    %18 = vector.shape_cast %17 : vector<1x1x8x1024xf32> to vector<8x1024xf32>
    %19 = vector.shape_cast %16 : vector<8x1024xf32> to vector<1x1x8x1024xf32>
    tpu.vector_store %arg5[%c0_9, %c1_10, %c0_11, %c0_12], %19 {strides = array<i32>} : memref<1x4x8x1024xf32, #tpu.memory_space<vmem>>, vector<1x1x8x1024xf32>,
    %c2 = arith.constant 2 : index
    %20 = memref.load %arg2[%c2] : memref<4xf32, #tpu.memory_space<smem>>
    %21 = vector.broadcast %20 : f32 to vector<8x1024xf32>
    %22 = arith.mulf %1, %21 : vector<8x1024xf32>
    %c2_13 = arith.constant 2 : index
    %23 = memref.load %arg3[%c2_13] : memref<4xf32, #tpu.memory_space<smem>>
    %24 = vector.broadcast %23 : f32 to vector<8x1024xf32>
    %25 = arith.addf %22, %24 : vector<8x1024xf32>
    %c0_14 = arith.constant 0 : index
    %c2_15 = arith.constant 2 : index
    %c0_16 = arith.constant 0 : index
    %c0_17 = arith.constant 0 : index
    %26 = vector.load %arg5[%c0_14, %c2_15, %c0_16, %c0_17] : memref<1x4x8x1024xf32, #tpu.memory_space<vmem>>, vector<1x1x8x1024xf32>
    %27 = vector.shape_cast %26 : vector<1x1x8x1024xf32> to vector<8x1024xf32>
    %28 = vector.shape_cast %25 : vector<8x1024xf32> to vector<1x1x8x1024xf32>
    tpu.vector_store %arg5[%c0_14, %c2_15, %c0_16, %c0_17], %28 {strides = array<i32>} : memref<1x4x8x1024xf32, #tpu.memory_space<vmem>>, vector<1x1x8x1024xf32>,
    %c3 = arith.constant 3 : index
    %29 = memref.load %arg2[%c3] : memref<4xf32, #tpu.memory_space<smem>>
    %30 = vector.broadcast %29 : f32 to vector<8x1024xf32>
    %31 = arith.mulf %1, %30 : vector<8x1024xf32>
    %c3_18 = arith.constant 3 : index
    %32 = memref.load %arg3[%c3_18] : memref<4xf32, #tpu.memory_space<smem>>
    %33 = vector.broadcast %32 : f32 to vector<8x1024xf32>
    %34 = arith.addf %31, %33 : vector<8x1024xf32>
    %c0_19 = arith.constant 0 : index
    %c3_20 = arith.constant 3 : index
    %c0_21 = arith.constant 0 : index
    %c0_22 = arith.constant 0 : index
    %35 = vector.load %arg5[%c0_19, %c3_20, %c0_21, %c0_22] : memref<1x4x8x1024xf32, #tpu.memory_space<vmem>>, vector<1x1x8x1024xf32>
    %36 = vector.shape_cast %35 : vector<1x1x8x1024xf32> to vector<8x1024xf32>
    %37 = vector.shape_cast %34 : vector<8x1024xf32> to vector<1x1x8x1024xf32>
    tpu.vector_store %arg5[%c0_19, %c3_20, %c0_21, %c0_22], %37 {strides = array<i32>} : memref<1x4x8x1024xf32, #tpu.memory_space<vmem>>, vector<1x1x8x1024xf32>,
    return
  }
  func.func @transform_0(%arg0: i32, %arg1: i32) -> i32 {
    %c0_i32 = arith.constant 0 : i32
    %c0_i32_0 = arith.constant 0 : i32
    return %c0_i32 : i32
  }
  func.func @transform_1(%arg0: i32, %arg1: i32) -> i32 {
    %c0_i32 = arith.constant 0 : i32
    %c0_i32_0 = arith.constant 0 : i32
    return %c0_i32 : i32
  }
  func.func @transform_2(%arg0: i32, %arg1: i32) -> (i32, i32, i32) {
    %c0_i32 = arith.constant 0 : i32
    %c0_i32_0 = arith.constant 0 : i32
    return %arg0, %arg1, %c0_i32 : i32, i32, i32
  }
  func.func @transform_3(%arg0: i32, %arg1: i32) -> (i32, i32, i32, i32) {
    %c0_i32 = arith.constant 0 : i32
    %c0_i32_0 = arith.constant 0 : i32
    %c0_i32_1 = arith.constant 0 : i32
    return %arg0, %c0_i32, %arg1, %c0_i32_0 : i32, i32, i32, i32
  }
}

</mosaic_0001>

<llo_original>
// kernel: tpu_custom_call.1
$region0: #{tpu_custom_call.1}
  #allocation0 [shape = 'u32[]', space=smem, size = 0x4, offset = 0x4, fixed_abs, tag = 'smem constant byte address 0x4 - core index']
  #allocation1 [shape = 'u32[144,128]{1,0:T(1,128)}', space=vmem, size = 0x12000, scoped, tag = 'internal scratch']
  %s0 = inlined_call_operand.hbm [shape: f32[4], index: 0, kind: input, shape index: {}]
  %s1 = inlined_call_operand.vmem [shape: f32[4], index: 1, kind: input, shape index: {}]
  %s2 = inlined_call_operand.hbm [shape: f32[2,8,1024], index: 2, kind: input, shape index: {}]
  %s3 = inlined_call_operand.hbm [shape: f32[2,4,8,1024], index: 3, kind: output, shape index: {}]
  %s4 = sld [smem:[#allocation0]]
  $region57: #{tpu_custom_call.1} parent=0
    _
  %s6 = ssub.s32 1, %s4
  %s7 = scalar_select 0, %s6, %s4
  $region1: #{tpu_custom_call.1} parent=0
    #allocation2 [shape = 'u8[512]{0}', space=smem, size = 0x200, scoped, tag = 'input window, operand 0, single buffered']
    #allocation3 [shape = 's32[2]{0}', space=sflag, size = 0x8, scoped, tag = 'scoped memory for tpu_custom_call.1']
    #allocation4 [shape = 's32[2]{0}', space=sflag, size = 0x8, scoped, tag = 'scoped memory for tpu_custom_call.1']
    #allocation5 [shape = 's32[2]{0}', space=sflag, size = 0x8, scoped, tag = 'scoped memory for tpu_custom_call.1']
    #allocation6 [shape = 's32[2]{0}', space=sflag, size = 0x8, scoped, tag = 'scoped memory for tpu_custom_call.1']
    #allocation7 [shape = 'u8[512]{0}', space=smem, size = 0x200, scoped, tag = 'input window, operand 1, single buffered']
    #allocation8 [shape = 'u8[65536]{0}', space=vmem, size = 0x10000, scoped, tag = 'input window, operand 2']
    #allocation9 [shape = 'u8[262144]{0}', space=vmem, size = 0x40000, scoped, tag = 'output window, operand 0']
    %8 = vsyncpa [#allocation5], 0
    %9 = vsyncpa [#allocation6], 0
    %10 = vsyncpa [#allocation3], 0
    %s11 = scalar_lea.sflag [#allocation3], 1
    %12 = vsyncpa %s11, 0
    %13 = vsyncpa [#allocation4], 0
    %s14 = scalar_lea.sflag [#allocation4], 1
    %15 = vsyncpa %s14, 0
    loop: start=0, step=1, limit=4
    $region2: #{tpu_custom_call.1} parent=1 // loop_pre_header
      _
    $region3: #{tpu_custom_call.1} parent=1 // loop_header
      %s17 = sphi 0, %s21
      %p18 = scmp.ge.s32.totalorder %s17, 4
      %s24 = sphi 0, %s36
      %s25 = sphi 0, %s32
      %s26 = sphi 0, %s24
      %s27 = sphi 0, %s25
      %s28 = sphi 0, %s26
      %s29 = sphi 0, %s27
      %s37 = sphi 0, %s37
      %s39 = sphi 0, %s37
      %s40 = sphi 0, %s39
      %s54 = sphi 0, %s40
      %s58 = sphi 0, %s58
      %s60 = sphi 0, %s58
      %s61 = sphi 0, %s60
      %s75 = sphi 0, %s61
      %s83 = sphi 0, %s85
      %s86 = sphi 0, %s83
      %s87 = sphi 0, %s86
      %s103 = sphi 0, %s87
      %s111 = sphi 0, %s113
      %s114 = sphi 0, %s111
      %s115 = sphi 0, %s114
      %s131 = sphi 0, %s115
    $region4: #{tpu_custom_call.1} parent=1 // loop_header_branch
      %20 = sbr.rel (%p18) target = $region8
    $region5: #{tpu_custom_call.1} parent=1 // loop_body
      %s22 = ssub.s32 %s17, 1
      %s23 = ssub.s32 %s17, 2
      %s30 = sadd.s32 1, %s25
      %p31 = scmp.ge.s32.totalorder %s30, 1
      %s32 = scalar_select %p31, 0, %s30
      %s33 = sadd.s32 1, %s24
      %s34 = scalar_select %p31, %s33, %s24
      %p35 = scmp.ge.s32.totalorder %s34, 2
      %s36 = scalar_select %p35, 0, %s34
      %s38 = sadd.s32 %s37, 1
      %p41 = scmp.eq.s32.totalorder %s17, 1
      %p42 = scmp.ne.s32.totalorder %s37, %s39
      %p43 = scmp.eq.s32.totalorder %s17, 0
      %p44 = por %p42, %p43
      %p45 = scmp.ne.s32.totalorder %s37, %s39
      %p46 = scmp.eq.s32.totalorder %s22, 1
      %p47 = por %p45, %p46
      %p48 = scmp.ne.s32.totalorder %s39, %s40
      %p49 = scmp.eq.s32.totalorder %s22, 0
      %p50 = por %p48, %p49
      %p51 = scmp.ne.s32.totalorder %s39, %s40
      %p52 = scmp.eq.s32.totalorder %s23, 1
      %p53 = por %p51, %p52
      %p55 = scmp.ne.s32.totalorder %s40, %s54
      %p56 = scmp.eq.s32.totalorder %s23, 0
      %p57 = por %p55, %p56
      %s59 = sadd.s32 %s58, 1
      %p62 = scmp.eq.s32.totalorder %s17, 1
      %p63 = scmp.ne.s32.totalorder %s58, %s60
      %p64 = scmp.eq.s32.totalorder %s17, 0
      %p65 = por %p63, %p64
      %p66 = scmp.ne.s32.totalorder %s58, %s60
      %p67 = scmp.eq.s32.totalorder %s22, 1
      %p68 = por %p66, %p67
      %p69 = scmp.ne.s32.totalorder %s60, %s61
      %p70 = scmp.eq.s32.totalorder %s22, 0
      %p71 = por %p69, %p70
      %p72 = scmp.ne.s32.totalorder %s60, %s61
      %p73 = scmp.eq.s32.totalorder %s23, 1
      %p74 = por %p72, %p73
      %p76 = scmp.ne.s32.totalorder %s61, %s75
      %p77 = scmp.eq.s32.totalorder %s23, 0
      %p78 = por %p76, %p77
      %s79 = ssub.s32 %s24, %s36
      %s80 = ssub.s32 %s25, %s32
      %s81 = sor.u32 %s79, %s80
      %p82 = scmp.eq.s32.totalorder %s81, 0
      %s84 = sadd.s32 %s83, 1
      %s85 = scalar_select %p82, %s83, %s84
      %p88 = pneg %p82
      %p89 = scmp.eq.s32.totalorder %s17, 1
      %p90 = por %p88, %p89
      %p91 = scmp.ne.s32.totalorder %s83, %s86
      %p92 = scmp.eq.s32.totalorder %s17, 0
      %p93 = por %p91, %p92
      %p94 = scmp.ne.s32.totalorder %s83, %s86
      %p95 = scmp.eq.s32.totalorder %s22, 1
      %p96 = por %p94, %p95
      %p97 = scmp.ne.s32.totalorder %s86, %s87
      %p98 = scmp.eq.s32.totalorder %s22, 0
      %p99 = por %p97, %p98
      %p100 = scmp.ne.s32.totalorder %s86, %s87
      %p101 = scmp.eq.s32.totalorder %s23, 1
      %p102 = por %p100, %p101
      %p104 = scmp.ne.s32.totalorder %s87, %s103
      %p105 = scmp.eq.s32.totalorder %s23, 0
      %p106 = por %p104, %p105
      %s107 = ssub.s32 %s24, %s36
      %s108 = ssub.s32 %s25, %s32
      %s109 = sor.u32 %s107, %s108
      %p110 = scmp.eq.s32.totalorder %s109, 0
      %s112 = sadd.s32 %s111, 1
      %s113 = scalar_select %p110, %s111, %s112
      %p116 = pneg %p110
      %p117 = scmp.eq.s32.totalorder %s17, 1
      %p118 = por %p116, %p117
      %p119 = scmp.ne.s32.totalorder %s111, %s114
      %p120 = scmp.eq.s32.totalorder %s17, 0
      %p121 = por %p119, %p120
      %p122 = scmp.ne.s32.totalorder %s111, %s114
      %p123 = scmp.eq.s32.totalorder %s22, 1
      %p124 = por %p122, %p123
      %p125 = scmp.ne.s32.totalorder %s114, %s115
      %p126 = scmp.eq.s32.totalorder %s22, 0
      %p127 = por %p125, %p126
      %p128 = scmp.ne.s32.totalorder %s114, %s115
      %p129 = scmp.eq.s32.totalorder %s23, 1
      %p130 = por %p128, %p129
      %p132 = scmp.ne.s32.totalorder %s115, %s131
      %p133 = scmp.eq.s32.totalorder %s23, 0
      %p134 = por %p132, %p133
      %p135 = scmp.le.s32.totalorder 1, %s17
      %p136 = scmp.lt.s32.totalorder %s17, 3
      %p137 = pnand %p135, %p136
      %p138 = pneg %p137
      // Predicated region
      $region9: #{tpu_custom_call.1} parent=5 // pred_check
        _
      $region10: #{tpu_custom_call.1} parent=5 // pred_check_branch
        %140 = sbr.rel (%p137) target = $region12
      $region11: #{tpu_custom_call.1} parent=5 // pred_region
        %s141 = ssub.s32 %s17, 1
        // Predicated region
        $region13: #{tpu_custom_call.1} parent=11 // pred_check
          %p142 = pneg %p50
        $region14: #{tpu_custom_call.1} parent=11 // pred_check_branch
          %144 = sbr.rel (%p142) target = $region16
        $region15: #{tpu_custom_call.1} parent=11 // pred_region
          %s146 = ssub.s32 16, 16
          %147 = vsyncadd [#allocation5], %s146
          %150 = dma.hbm_to_smem %s0, 16, [#allocation2], [#allocation5]
        $region16: #{tpu_custom_call.1} parent=11 // pred_fallthru
          _
        // Predicated region
        $region17: #{tpu_custom_call.1} parent=11 // pred_check
          %p151 = pneg %p71
        $region18: #{tpu_custom_call.1} parent=11 // pred_check_branch
          %153 = sbr.rel (%p151) target = $region20
        $region19: #{tpu_custom_call.1} parent=11 // pred_region
          %s155 = ssub.s32 16, 16
          %156 = vsyncadd [#allocation6], %s155
          %s158 = sshll.u32 %s1, 4
          %s159 = int_to_ptr.vmem [resolvable:$true] %s158
          %161 = dma.vmem_to_smem %s159, 16, [#allocation7], [#allocation6]
        $region20: #{tpu_custom_call.1} parent=11 // pred_fallthru
          _
      $region12: #{tpu_custom_call.1} parent=5 // pred_fallthru
        _
      %p162 = scmp.lt.s32.totalorder %s17, 2
      // Predicated region
      $region21: #{tpu_custom_call.1} parent=5 // pred_check
        %p163 = pneg %p162
      $region22: #{tpu_custom_call.1} parent=5 // pred_check_branch
        %165 = sbr.rel (%p163) target = $region24
      $region23: #{tpu_custom_call.1} parent=5 // pred_region
        // Predicated region
        $region25: #{tpu_custom_call.1} parent=23 // pred_check
          %p166 = pneg %p93
        $region26: #{tpu_custom_call.1} parent=23 // pred_check_branch
          %168 = sbr.rel (%p166) target = $region28
        $region27: #{tpu_custom_call.1} parent=23 // pred_region
          %s169 = sand.u32 %s83, 1
          %s170 = scalar_lea.sflag [#allocation3], %s169
          %s171 = sand.u32 %s83, 1
          %s172 = smul.addr %s171, 64
          %s173 = scalar_lea.vmem [#allocation8], %s172
          %s175 = ssub.s32 1024, 1024
          %176 = vsyncadd %s170, %s175
          %s177 = smul.addr %s25, 8
          %s178 = smul.addr %s24, 8
          %s179 = sadd.s32 %s177, %s178
          %s180 = smul.addr %s179, 128
          %s181 = scalar_lea.hbm %s2, %s180
          %s183 = sshll.u32 %s173, 4
          %s184 = int_to_ptr.vmem [resolvable:$true] %s183
          %186 = dma.hbm_to_vmem [thread:$0]  %s181, 1024, %s184, %s170
        $region28: #{tpu_custom_call.1} parent=23 // pred_fallthru
          _
      $region24: #{tpu_custom_call.1} parent=5 // pred_fallthru
        _
      %p187 = scmp.le.s32.totalorder 1, %s17
      %p188 = scmp.lt.s32.totalorder %s17, 3
      %p189 = pnand %p187, %p188
      %p190 = pneg %p189
      // Predicated region
      $region29: #{tpu_custom_call.1} parent=5 // pred_check
        _
      $region30: #{tpu_custom_call.1} parent=5 // pred_check_branch
        %192 = sbr.rel (%p189) target = $region32
      $region31: #{tpu_custom_call.1} parent=5 // pred_region
        %s193 = ssub.s32 %s17, 1
        // Predicated region
        $region33: #{tpu_custom_call.1} parent=31 // pred_check
          %p194 = pneg %p50
        $region34: #{tpu_custom_call.1} parent=31 // pred_check_branch
          %196 = sbr.rel (%p194) target = $region36
        $region35: #{tpu_custom_call.1} parent=31 // pred_region
          %197 = dma.done [#allocation5], 16
        $region36: #{tpu_custom_call.1} parent=31 // pred_fallthru
          _
        // Predicated region
        $region37: #{tpu_custom_call.1} parent=31 // pred_check
          %p198 = pneg %p71
        $region38: #{tpu_custom_call.1} parent=31 // pred_check_branch
          %200 = sbr.rel (%p198) target = $region40
        $region39: #{tpu_custom_call.1} parent=31 // pred_region
          %201 = dma.done [#allocation6], 16
        $region40: #{tpu_custom_call.1} parent=31 // pred_fallthru
          _
        %s202 = sand.u32 %s86, 1
        %s203 = scalar_lea.sflag [#allocation3], %s202
        %s204 = sand.u32 %s86, 1
        %s205 = smul.addr %s204, 64
        %s206 = scalar_lea.vmem [#allocation8], %s205
        // Predicated region
        $region41: #{tpu_custom_call.1} parent=31 // pred_check
          %p207 = pneg %p99
        $region42: #{tpu_custom_call.1} parent=31 // pred_check_branch
          %209 = sbr.rel (%p207) target = $region44
        $region43: #{tpu_custom_call.1} parent=31 // pred_region
          %210 = dma.done %s203, 1024
        $region44: #{tpu_custom_call.1} parent=31 // pred_fallthru
          _
        %211 = sfence
        %p212 = pneg %p50
        %p213 = pneg %p47
        %p214 = pneg %p71
        %p215 = pneg %p68
        %s216 = sand.u32 %s86, 1
        %s217 = scalar_lea.sflag [#allocation3], %s216
        %s218 = sand.u32 %s86, 1
        %s219 = smul.addr %s218, 64
        %s220 = scalar_lea.vmem [#allocation8], %s219
        %p221 = pneg %p99
        %p222 = pneg %p96
        %p223 = pneg %p127
        %p224 = pneg %p124
        %s225 = sand.u32 %s114, 1
        %s226 = scalar_lea.sflag [#allocation4], %s225
        %s227 = sand.u32 %s114, 1
        %s228 = smul.addr %s227, 256
        %s229 = scalar_lea.vmem [#allocation9], %s228
        %v230 = vld [vmem:[%s206] sm:$0xff]
        %v231 = vld [vmem:[%s206 + $0x8] sm:$0xff]
        %v232 = vld [vmem:[%s206 + $0x10] sm:$0xff]
        %v233 = vld [vmem:[%s206 + $0x18] sm:$0xff]
        %v234 = vld [vmem:[%s206 + $0x20] sm:$0xff]
        %v235 = vld [vmem:[%s206 + $0x28] sm:$0xff]
        %v236 = vld [vmem:[%s206 + $0x30] sm:$0xff]
        %v237 = vld [vmem:[%s206 + $0x38] sm:$0xff]
        %s238 = sld [smem:[#allocation2]]
        %v239 = vstv %s238
        %v240 = vmul.f32 %v230, %v239
        %v241 = vmul.f32 %v231, %v239
        %v242 = vmul.f32 %v232, %v239
        %v243 = vmul.f32 %v233, %v239
        %v244 = vmul.f32 %v234, %v239
        %v245 = vmul.f32 %v235, %v239
        %v246 = vmul.f32 %v236, %v239
        %v247 = vmul.f32 %v237, %v239
        %s248 = sld [smem:[#allocation7]]
        %v249 = vstv %s248
        %v250 = vadd.f32 %v240, %v249
        %v251 = vadd.f32 %v241, %v249
        %v252 = vadd.f32 %v242, %v249
        %v253 = vadd.f32 %v243, %v249
        %v254 = vadd.f32 %v244, %v249
        %v255 = vadd.f32 %v245, %v249
        %v256 = vadd.f32 %v246, %v249
        %v257 = vadd.f32 %v247, %v249
        %258 = vst [vmem:[%s229] sm:$0xff] %v250
        %259 = vst [vmem:[%s229 + $0x8] sm:$0xff] %v251
        %260 = vst [vmem:[%s229 + $0x10] sm:$0xff] %v252
        %261 = vst [vmem:[%s229 + $0x18] sm:$0xff] %v253
        %262 = vst [vmem:[%s229 + $0x20] sm:$0xff] %v254
        %263 = vst [vmem:[%s229 + $0x28] sm:$0xff] %v255
        %264 = vst [vmem:[%s229 + $0x30] sm:$0xff] %v256
        %265 = vst [vmem:[%s229 + $0x38] sm:$0xff] %v257
        %s266 = sld [smem:[#allocation2 + $0x1]]
        %v267 = vstv %s266
        %v268 = vmul.f32 %v230, %v267
        %v269 = vmul.f32 %v231, %v267
        %v270 = vmul.f32 %v232, %v267
        %v271 = vmul.f32 %v233, %v267
        %v272 = vmul.f32 %v234, %v267
        %v273 = vmul.f32 %v235, %v267
        %v274 = vmul.f32 %v236, %v267
        %v275 = vmul.f32 %v237, %v267
        %s276 = sld [smem:[#allocation7 + $0x1]]
        %v277 = vstv %s276
        %v278 = vadd.f32 %v268, %v277
        %v279 = vadd.f32 %v269, %v277
        %v280 = vadd.f32 %v270, %v277
        %v281 = vadd.f32 %v271, %v277
        %v282 = vadd.f32 %v272, %v277
        %v283 = vadd.f32 %v273, %v277
        %v284 = vadd.f32 %v274, %v277
        %v285 = vadd.f32 %v275, %v277
        %s286 = scalar_lea.vmem %s229, 64 [#allocation9]
        %287 = vst [vmem:[%s286] sm:$0xff] %v278
        %288 = vst [vmem:[%s286 + $0x8] sm:$0xff] %v279
        %289 = vst [vmem:[%s286 + $0x10] sm:$0xff] %v280
        %290 = vst [vmem:[%s286 + $0x18] sm:$0xff] %v281
        %291 = vst [vmem:[%s286 + $0x20] sm:$0xff] %v282
        %292 = vst [vmem:[%s286 + $0x28] sm:$0xff] %v283
        %293 = vst [vmem:[%s286 + $0x30] sm:$0xff] %v284
        %294 = vst [vmem:[%s286 + $0x38] sm:$0xff] %v285
        %s295 = sld [smem:[#allocation2 + $0x2]]
        %v296 = vstv %s295
        %v297 = vmul.f32 %v230, %v296
        %v298 = vmul.f32 %v231, %v296
        %v299 = vmul.f32 %v232, %v296
        %v300 = vmul.f32 %v233, %v296
        %v301 = vmul.f32 %v234, %v296
        %v302 = vmul.f32 %v235, %v296
        %v303 = vmul.f32 %v236, %v296
        %v304 = vmul.f32 %v237, %v296
        %s305 = sld [smem:[#allocation7 + $0x2]]
        %v306 = vstv %s305
        %v307 = vadd.f32 %v297, %v306
        %v308 = vadd.f32 %v298, %v306
        %v309 = vadd.f32 %v299, %v306
        %v310 = vadd.f32 %v300, %v306
        %v311 = vadd.f32 %v301, %v306
        %v312 = vadd.f32 %v302, %v306
        %v313 = vadd.f32 %v303, %v306
        %v314 = vadd.f32 %v304, %v306
        %s315 = scalar_lea.vmem %s229, 128 [#allocation9]
        %316 = vst [vmem:[%s315] sm:$0xff] %v307
        %317 = vst [vmem:[%s315 + $0x8] sm:$0xff] %v308
        %318 = vst [vmem:[%s315 + $0x10] sm:$0xff] %v309
        %319 = vst [vmem:[%s315 + $0x18] sm:$0xff] %v310
        %320 = vst [vmem:[%s315 + $0x20] sm:$0xff] %v311
        %321 = vst [vmem:[%s315 + $0x28] sm:$0xff] %v312
        %322 = vst [vmem:[%s315 + $0x30] sm:$0xff] %v313
        %323 = vst [vmem:[%s315 + $0x38] sm:$0xff] %v314
        %s324 = sld [smem:[#allocation2 + $0x3]]
        %v325 = vstv %s324
        %v326 = vmul.f32 %v230, %v325
        %v327 = vmul.f32 %v231, %v325
        %v328 = vmul.f32 %v232, %v325
        %v329 = vmul.f32 %v233, %v325
        %v330 = vmul.f32 %v234, %v325
        %v331 = vmul.f32 %v235, %v325
        %v332 = vmul.f32 %v236, %v325
        %v333 = vmul.f32 %v237, %v325
        %s334 = sld [smem:[#allocation7 + $0x3]]
        %v335 = vstv %s334
        %v336 = vadd.f32 %v326, %v335
        %v337 = vadd.f32 %v327, %v335
        %v338 = vadd.f32 %v328, %v335
        %v339 = vadd.f32 %v329, %v335
        %v340 = vadd.f32 %v330, %v335
        %v341 = vadd.f32 %v331, %v335
        %v342 = vadd.f32 %v332, %v335
        %v343 = vadd.f32 %v333, %v335
        %s344 = scalar_lea.vmem %s229, 192 [#allocation9]
        %345 = vst [vmem:[%s344] sm:$0xff] %v336
        %346 = vst [vmem:[%s344 + $0x8] sm:$0xff] %v337
        %347 = vst [vmem:[%s344 + $0x10] sm:$0xff] %v338
        %348 = vst [vmem:[%s344 + $0x18] sm:$0xff] %v339
        %349 = vst [vmem:[%s344 + $0x20] sm:$0xff] %v340
        %350 = vst [vmem:[%s344 + $0x28] sm:$0xff] %v341
        %351 = vst [vmem:[%s344 + $0x30] sm:$0xff] %v342
        %352 = vst [vmem:[%s344 + $0x38] sm:$0xff] %v343
        %s353 = sand.u32 %s114, 1
        %s354 = scalar_lea.sflag [#allocation4], %s353
        %s355 = sand.u32 %s114, 1
        %s356 = smul.addr %s355, 256
        %s357 = scalar_lea.vmem [#allocation9], %s356
        // Predicated region
        $region45: #{tpu_custom_call.1} parent=31 // pred_check
          %p358 = pneg %p124
        $region46: #{tpu_custom_call.1} parent=31 // pred_check_branch
          %360 = sbr.rel (%p358) target = $region48
        $region47: #{tpu_custom_call.1} parent=31 // pred_region
          %s362 = ssub.s32 4096, 4096
          %363 = vsyncadd %s354, %s362
          %s364 = smul.addr %s27, 8
          %s365 = smul.addr %s26, 32
          %s366 = sadd.s32 %s364, %s365
          %s367 = smul.addr %s366, 128
          %s368 = scalar_lea.hbm %s3, %s367
          %s369 = sshll.u32 %s357, 4
          %s370 = int_to_ptr.vmem [resolvable:$true] %s369
          %375 = dma.vmem_to_hbm [thread:$0]  %s370, 4096, %s368, %s354, 1024, 1024, 64
        $region48: #{tpu_custom_call.1} parent=31 // pred_fallthru
          _
      $region32: #{tpu_custom_call.1} parent=5 // pred_fallthru
        _
      %p376 = scmp.le.s32.totalorder 2, %s17
      // Predicated region
      $region49: #{tpu_custom_call.1} parent=5 // pred_check
        %p377 = pneg %p376
      $region50: #{tpu_custom_call.1} parent=5 // pred_check_branch
        %379 = sbr.rel (%p377) target = $region52
      $region51: #{tpu_custom_call.1} parent=5 // pred_region
        %s380 = ssub.s32 %s17, 2
        // Predicated region
        $region53: #{tpu_custom_call.1} parent=51 // pred_check
          %p381 = pneg %p130
        $region54: #{tpu_custom_call.1} parent=51 // pred_check_branch
          %383 = sbr.rel (%p381) target = $region56
        $region55: #{tpu_custom_call.1} parent=51 // pred_region
          %s384 = sand.u32 %s115, 1
          %s385 = scalar_lea.sflag [#allocation4], %s384
          %s386 = sand.u32 %s115, 1
          %s387 = smul.addr %s386, 256
          %s388 = scalar_lea.vmem [#allocation9], %s387
          %389 = dma.done %s385, 4096
        $region56: #{tpu_custom_call.1} parent=51 // pred_fallthru
          _
      $region52: #{tpu_custom_call.1} parent=5 // pred_fallthru
        _
    $region6: #{tpu_custom_call.1} parent=1 // loop_footer
      %s21 = sadd.s32 1, %s17
    $region7: #{tpu_custom_call.1} parent=1 // loop_footer_branch
      %16 = sbr.rel target = $region3
    $region8: #{tpu_custom_call.1} parent=1 // loop_exit
      _
    %390 = vsyncpa [#allocation3], 1
    %s391 = scalar_lea.sflag [#allocation3], 1
    %392 = vsyncpa %s391, 1
    %393 = vsyncpa [#allocation4], 1
    %s394 = scalar_lea.sflag [#allocation4], 1
    %395 = vsyncpa %s394, 1
    %396 = vsyncpa [#allocation5], 1
    %s397 = scalar_lea.sflag [#allocation5], 1
    %398 = vsyncpa %s397, 1
    %399 = vsyncpa [#allocation6], 1
    %s400 = scalar_lea.sflag [#allocation6], 1
    %401 = vsyncpa %s400, 1

</llo_original>
